<compile_context>
chip_gen: v7x
topology: tpu7x:2x2x1
jax: 0.10.0
libtpu: 0.0.40
codegen_flags: <defaults>
</compile_context>

<pallas_src>
import jax
import jax.numpy as jnp
from jax.experimental import pallas as pl
from jax.experimental.pallas import tpu as pltpu


def _rope_kernel(x_ref, cos_ref, sin_e_ref, sin_o_ref, o_ref):
    # x_ref / o_ref: (TB, TS, DL)     tables: (TS, DL), DL = fold * d_k (lane-dense)
    x = x_ref[...]
    cos = cos_ref[...]
    sin_e = sin_e_ref[...]
    sin_o = sin_o_ref[...]
    if x.dtype != cos.dtype:
        x = x.astype(cos.dtype)
    dl = x.shape[-1]
    last = x.ndim - 1
    # Adjacent-pair neighbours via two cheap XLU lane rotations.
    # pltpu.roll follows jnp.roll semantics: out[j] = in[(j - shift) mod dl].
    x_next = pltpu.roll(x, shift=dl - 1, axis=last)   # out[j] = x[j + 1]
    x_prev = pltpu.roll(x, shift=1, axis=last)        # out[j] = x[j - 1]
    # sin_e is non-zero only on even lanes (-sin), sin_o only on odd lanes (+sin),
    # so roll wrap-around lanes are always multiplied by zero -> no parity select.
    o_ref[...] = (x * cos + x_next * sin_e + x_prev * sin_o).astype(o_ref.dtype)


def make_rope_tables(theta: float, d_k: int, seq_len: int):
    """Same math as the torch module's cos_cached / sin_cached buffers."""
    assert d_k % 2 == 0
    d = jnp.arange(0, d_k, 2, dtype=jnp.float32) / d_k
    freq = 1.0 / (theta ** d)
    t = jnp.arange(seq_len, dtype=jnp.float32)
    freqs = t[:, None] * freq[None, :]                # (seq_len, d_k // 2)
    return jnp.cos(freqs), jnp.sin(freqs)


def _tile_budget():
    """(x-tile byte budget, vmem_limit_bytes), adapted to VMEM capacity."""
    tile_bytes = 4 * 1024 * 1024          # safe for v7x (64 MiB VMEM per TC)
    vmem_limit = 48 * 1024 * 1024
    try:
        cap = int(getattr(pltpu.get_tpu_info(), "vmem_capacity_bytes", 0))
        if cap >= 100 * 1024 * 1024:      # 128 MiB parts (v5e / v6e): go bigger
            tile_bytes = 8 * 1024 * 1024
            vmem_limit = 80 * 1024 * 1024
    except Exception:
        pass
    return tile_bytes, vmem_limit


def pallas_rope_expanded(x, cos_full, sin_even, sin_odd):
    """Apply RoPE given pre-expanded lane-dense tables of shape (S, D)."""
    *lead, S, D = x.shape
    assert D % 2 == 0 and cos_full.shape == (S, D)

    B = 1
    for s in lead:
        B *= s
    B = max(B, 1)

    # Fold k sequence rows into the lane axis when D < 128 so output stores are
    # lane-dense (>= 128 lanes).  Pure reshape; pairs never straddle a fold boundary.
    fold = 1
    if D < 128 and 128 % D == 0:
        k = 128 // D
        if S % k == 0:
            fold = k
    S_f = S // fold
    DL = D * fold

    x3 = x.reshape(B, S_f, DL)
    cos_f = cos_full.reshape(S_f, DL)
    sin_e_f = sin_even.reshape(S_f, DL)
    sin_o_f = sin_odd.reshape(S_f, DL)

    itemsize = jnp.dtype(x.dtype).itemsize
    sub = {4: 8, 2: 16, 1: 32}.get(itemsize, 8)
    tile_bytes, vmem_limit = _tile_budget()
    max_rows = max(1, tile_bytes // (DL * itemsize))

    if S_f <= max_rows:
        ts = S_f                                    # full seq dim -> always legal
        tb = min(B, max(1, max_rows // max(S_f, 1)))
    else:
        ts = max(sub, (max_rows // sub) * sub)      # sublane-aligned tile rows
        if ts >= S_f:
            ts = S_f
        tb = 1

    # Seq tiles outer, batch tiles inner: the table block index is constant along the
    # innermost axis, so Pallas fetches cos/sin once per seq tile (not every step).
    grid = (pl.cdiv(S_f, ts), pl.cdiv(B, tb))

    out3 = pl.pallas_call(
        _rope_kernel,
        out_shape=jax.ShapeDtypeStruct((B, S_f, DL), x.dtype),
        grid_spec=pltpu.PrefetchScalarGridSpec(
            num_scalar_prefetch=0,
            grid=grid,
            in_specs=[
                pl.BlockSpec((tb, ts, DL), lambda s, b: (b, s, 0)),
                pl.BlockSpec((ts, DL), lambda s, b: (s, 0)),
                pl.BlockSpec((ts, DL), lambda s, b: (s, 0)),
                pl.BlockSpec((ts, DL), lambda s, b: (s, 0)),
            ],
            out_specs=pl.BlockSpec((tb, ts, DL), lambda s, b: (b, s, 0)),
        ),
        compiler_params=pltpu.CompilerParams(
            dimension_semantics=("parallel", "parallel"),
            vmem_limit_bytes=vmem_limit,
        ),
    )(x3, cos_f, sin_e_f, sin_o_f)

    return out3.reshape(x.shape)


class PallasRoPE:
    """JAX/Pallas equivalent of the PyTorch RoPE module."""

    def __init__(self, theta: float, d_k: int, seq_len: int):
        assert d_k % 2 == 0
        self.d_k = d_k
        self.seq_len = seq_len
        cos, sin = make_rope_tables(theta, d_k, seq_len)     # (seq_len, d_k // 2)
        self.cos_cached = cos
        self.sin_cached = sin
        # Pair-expanded, lane-dense tables, built ONCE (not per call):
        #   cos_full[t, 2i] = cos_full[t, 2i+1] = cos_i(t)
        #   sin_even[t, 2i] = -sin_i(t),  sin_even[t, 2i+1] = 0
        #   sin_odd [t, 2i] = 0,          sin_odd [t, 2i+1] = +sin_i(t)
        cos_rep = jnp.repeat(cos, 2, axis=-1)
        sin_rep = jnp.repeat(sin, 2, axis=-1)
        even = jnp.tile(jnp.array([1.0, 0.0], jnp.float32), d_k // 2)
        odd = jnp.tile(jnp.array([0.0, 1.0], jnp.float32), d_k // 2)
        self.cos_full = cos_rep
        self.sin_even = -sin_rep * even[None, :]
        self.sin_odd = sin_rep * odd[None, :]

    def __call__(self, x, seq_len: int | None = None, pos_ids=None):
        *_, S, D = x.shape
        assert D == self.d_k
        if pos_ids is None:
            if seq_len is None:
                seq_len = S
            assert S == seq_len
            cos_full = self.cos_full[:seq_len]
            sin_even = self.sin_even[:seq_len]
            sin_odd = self.sin_odd[:seq_len]
        else:
            pos_ids = jnp.asarray(pos_ids)
            if pos_ids.ndim != 1:
                # TODO(synk): batched ('... seq_len') pos_ids would need per-batch table
                # blocks; only shared 1-D position ids are supported here.
                raise NotImplementedError("only shared 1-D pos_ids are supported")
            assert pos_ids.shape[0] == S
            cos_full = self.cos_full[pos_ids]
            sin_even = self.sin_even[pos_ids]
            sin_odd = self.sin_odd[pos_ids]
        if x.dtype == jnp.bfloat16:
            # Native bf16 VPU compute on v6e/v7x; halves table traffic and VALU work.
            cos_full = cos_full.astype(jnp.bfloat16)
            sin_even = sin_even.astype(jnp.bfloat16)
            sin_odd = sin_odd.astype(jnp.bfloat16)
        return pallas_rope_expanded(x, cos_full, sin_even, sin_odd)


def _rope_ref(x, cos, sin):
    """Pure-JAX reference with the exact torch-module math (interleaved pairs)."""
    x1 = x[..., 0::2]
    x2 = x[..., 1::2]
    x1n = x1 * cos - x2 * sin
    x2n = x1 * sin + x2 * cos
    return jnp.stack([x1n, x2n], axis=-1).reshape(x.shape)


if __name__ == "__main__":
    key = jax.random.PRNGKey(0)
    theta = 10000.0

    # --- d_k = 32, (batch, seq) = (2, 8), f32, default path + pos_ids path ---
    d_k, seq = 32, 8
    k1, k2 = jax.random.split(key)
    x = jax.random.normal(k1, (2, seq, d_k), dtype=jnp.float32)
    rope = PallasRoPE(theta, d_k, seq)

    y = jax.block_until_ready(rope(x, seq_len=seq))
    ref = _rope_ref(x, rope.cos_cached[:seq], rope.sin_cached[:seq])
    assert y.shape == x.shape and y.dtype == x.dtype
    assert jnp.allclose(y, ref, atol=1e-5, rtol=1e-5), "mismatch (pos_ids=None)"

    pos_ids = jnp.array([3, 1, 4, 1, 5, 2, 6, 0], dtype=jnp.int32)
    y2 = jax.block_until_ready(rope(x, seq_len=seq, pos_ids=pos_ids))
    ref2 = _rope_ref(x, rope.cos_cached[pos_ids], rope.sin_cached[pos_ids])
    assert jnp.allclose(y2, ref2, atol=1e-5, rtol=1e-5), "mismatch (pos_ids)"

    # --- d_k = 64 (common head dim, exercises lane folding) with extra leading dims ---
    d_k2, seq2 = 64, 8
    x2_in = jax.random.normal(k2, (2, 2, seq2, d_k2), dtype=jnp.float32)
    rope2 = PallasRoPE(theta, d_k2, seq2)
    y3 = jax.block_until_ready(rope2(x2_in, seq_len=seq2))
    ref3 = _rope_ref(x2_in, rope2.cos_cached[:seq2], rope2.sin_cached[:seq2])
    assert jnp.allclose(y3, ref3, atol=1e-5, rtol=1e-5), "mismatch (d_k=64, 4-D input)"

    print("KERNEL_OK")
</pallas_src>

<mosaic_0001>
module attributes {stable_mosaic.version = 11 : i64} {
  func.func @_rope_kernel(%arg0: i32, %arg1: i32, %arg2: memref<2x2x128xf32, #tpu.memory_space<vmem>>, %arg3: memref<2x128xf32, #tpu.memory_space<vmem>>, %arg4: memref<2x128xf32, #tpu.memory_space<vmem>>, %arg5: memref<2x128xf32, #tpu.memory_space<vmem>>, %arg6: memref<2x2x128xf32, #tpu.memory_space<vmem>>) attributes {dimension_semantics = [#tpu.dimension_semantics<parallel>, #tpu.dimension_semantics<parallel>], iteration_bounds = array<i64: 1, 1>, scalar_prefetch = 0 : i64, scratch_operands = 0 : i64, tpu.core_type = #tpu.core_type<tc>, window_params = [{transform_indices = @transform_0, window_bounds = array<i64: 2, 2, 128>}, {transform_indices = @transform_1, window_bounds = array<i64: 2, 128>}, {transform_indices = @transform_2, window_bounds = array<i64: 2, 128>}, {transform_indices = @transform_3, window_bounds = array<i64: 2, 128>}, {transform_indices = @transform_4, window_bounds = array<i64: 2, 2, 128>}]} {
    %c0 = arith.constant 0 : index
    %c0_0 = arith.constant 0 : index
    %c0_1 = arith.constant 0 : index
    %0 = vector.load %arg2[%c0, %c0_0, %c0_1] : memref<2x2x128xf32, #tpu.memory_space<vmem>>, vector<2x2x128xf32>
    %c0_2 = arith.constant 0 : index
    %c0_3 = arith.constant 0 : index
    %1 = vector.load %arg3[%c0_2, %c0_3] : memref<2x128xf32, #tpu.memory_space<vmem>>, vector<2x128xf32>
    %c0_4 = arith.constant 0 : index
    %c0_5 = arith.constant 0 : index
    %2 = vector.load %arg4[%c0_4, %c0_5] : memref<2x128xf32, #tpu.memory_space<vmem>>, vector<2x128xf32>
    %c0_6 = arith.constant 0 : index
    %c0_7 = arith.constant 0 : index
    %3 = vector.load %arg5[%c0_6, %c0_7] : memref<2x128xf32, #tpu.memory_space<vmem>>, vector<2x128xf32>
    %c127_i32 = arith.constant 127 : i32
    %4 = tpu.dynamic_rotate %0 by %c127_i32 dim 2 : vector<2x2x128xf32>, i32 -> vector<2x2x128xf32>
    %c1_i32 = arith.constant 1 : i32
    %5 = tpu.dynamic_rotate %0 by %c1_i32 dim 2 : vector<2x2x128xf32>, i32 -> vector<2x2x128xf32>
    %6 = vector.shape_cast %1 : vector<2x128xf32> to vector<1x2x128xf32>
    %7 = vector.broadcast %6 : vector<1x2x128xf32> to vector<2x2x128xf32>
    %8 = arith.mulf %0, %7 : vector<2x2x128xf32>
    %9 = vector.shape_cast %2 : vector<2x128xf32> to vector<1x2x128xf32>
    %10 = vector.broadcast %9 : vector<1x2x128xf32> to vector<2x2x128xf32>
    %11 = arith.mulf %4, %10 : vector<2x2x128xf32>
    %12 = arith.addf %8, %11 : vector<2x2x128xf32>
    %13 = vector.shape_cast %3 : vector<2x128xf32> to vector<1x2x128xf32>
    %14 = vector.broadcast %13 : vector<1x2x128xf32> to vector<2x2x128xf32>
    %15 = arith.mulf %5, %14 : vector<2x2x128xf32>
    %16 = arith.addf %12, %15 : vector<2x2x128xf32>
    %c0_8 = arith.constant 0 : index
    %c0_9 = arith.constant 0 : index
    %c0_10 = arith.constant 0 : index
    %17 = vector.load %arg6[%c0_8, %c0_9, %c0_10] : memref<2x2x128xf32, #tpu.memory_space<vmem>>, vector<2x2x128xf32>
    tpu.vector_store %arg6[%c0_8, %c0_9, %c0_10], %16 {strides = array<i32>} : memref<2x2x128xf32, #tpu.memory_space<vmem>>, vector<2x2x128xf32>,
    return
  }
  func.func @transform_0(%arg0: i32, %arg1: i32) -> (i32, i32, i32) {
    %c0_i32 = arith.constant 0 : i32
    %c0_i32_0 = arith.constant 0 : i32
    return %arg1, %arg0, %c0_i32 : i32, i32, i32
  }
  func.func @transform_1(%arg0: i32, %arg1: i32) -> (i32, i32) {
    %c0_i32 = arith.constant 0 : i32
    %c0_i32_0 = arith.constant 0 : i32
    return %arg0, %c0_i32 : i32, i32
  }
  func.func @transform_2(%arg0: i32, %arg1: i32) -> (i32, i32) {
    %c0_i32 = arith.constant 0 : i32
    %c0_i32_0 = arith.constant 0 : i32
    return %arg0, %c0_i32 : i32, i32
  }
  func.func @transform_3(%arg0: i32, %arg1: i32) -> (i32, i32) {
    %c0_i32 = arith.constant 0 : i32
    %c0_i32_0 = arith.constant 0 : i32
    return %arg0, %c0_i32 : i32, i32
  }
  func.func @transform_4(%arg0: i32, %arg1: i32) -> (i32, i32, i32) {
    %c0_i32 = arith.constant 0 : i32
    %c0_i32_0 = arith.constant 0 : i32
    return %arg1, %arg0, %c0_i32 : i32, i32, i32
  }
}

</mosaic_0001>

<llo_original>
// kernel: tpu_custom_call.1
$region0: #{tpu_custom_call.1}
  #allocation0 [shape = 'u32[]', space=smem, size = 0x4, offset = 0x4, fixed_abs, tag = 'smem constant byte address 0x4 - core index']
  #allocation1 [shape = 'u32[144,128]{1,0:T(1,128)}', space=vmem, size = 0x12000, scoped, tag = 'internal scratch']
  %s0 = inlined_call_operand.hbm [shape: f32[2,2,128], index: 0, kind: input, shape index: {}]
  %s1 = inlined_call_operand.vmem [shape: f32[2,128], index: 1, kind: input, shape index: {}]
  %s2 = inlined_call_operand.vmem [shape: f32[2,128], index: 2, kind: input, shape index: {}]
  %s3 = inlined_call_operand.vmem [shape: f32[2,128], index: 3, kind: input, shape index: {}]
  %s4 = inlined_call_operand.hbm [shape: f32[2,2,128], index: 4, kind: output, shape index: {}]
  %s5 = sld [smem:[#allocation0]]
  $region30: #{tpu_custom_call.1} parent=0
    _
  %s7 = ssub.s32 1, %s5
  %s8 = scalar_select 0, %s7, %s5
  $region1: #{tpu_custom_call.1} parent=0
    #allocation2 [shape = 'u8[2048]{0}', space=vmem, size = 0x800, scoped, tag = 'input window, operand 0, single buffered']
    #allocation3 [shape = 's32[1]{0}', space=sflag, size = 0x4, scoped, tag = 'scoped memory for tpu_custom_call.1']
    #allocation4 [shape = 's32[1]{0}', space=sflag, size = 0x4, scoped, tag = 'scoped memory for tpu_custom_call.1']
    #allocation5 [shape = 'u8[2048]{0}', space=vmem, size = 0x800, scoped, tag = 'output window, operand 0, single buffered']
    %9 = vsyncpa [#allocation3], 0
    %10 = vsyncpa [#allocation4], 0
    // Predicated region
    $region2: #{tpu_custom_call.1} parent=1 // pred_check
      _
    $region3: #{tpu_custom_call.1} parent=1 // pred_check_branch
      %12 = sbr.rel (0) target = $region5
    $region4: #{tpu_custom_call.1} parent=1 // pred_region
      %s14 = ssub.s32 64, 64
      %15 = vsyncadd [#allocation3], %s14
      %s16 = sshll.u32 [#allocation2], 4
      %s17 = int_to_ptr.vmem [resolvable:$true] %s16
      %22 = dma.hbm_to_vmem [thread:$0]  %s0, 64, %s17, [#allocation3], 32, 32, 2
    $region5: #{tpu_custom_call.1} parent=1 // pred_fallthru
      _
    // Predicated region
    $region6: #{tpu_custom_call.1} parent=1 // pred_check
      _
    $region7: #{tpu_custom_call.1} parent=1 // pred_check_branch
      %24 = sbr.rel (0) target = $region9
    $region8: #{tpu_custom_call.1} parent=1 // pred_region
      _
    $region9: #{tpu_custom_call.1} parent=1 // pred_fallthru
      _
    // Predicated region
    $region10: #{tpu_custom_call.1} parent=1 // pred_check
      _
    $region11: #{tpu_custom_call.1} parent=1 // pred_check_branch
      %26 = sbr.rel (0) target = $region13
    $region12: #{tpu_custom_call.1} parent=1 // pred_region
      _
    $region13: #{tpu_custom_call.1} parent=1 // pred_fallthru
      _
    // Predicated region
    $region14: #{tpu_custom_call.1} parent=1 // pred_check
      _
    $region15: #{tpu_custom_call.1} parent=1 // pred_check_branch
      %28 = sbr.rel (0) target = $region17
    $region16: #{tpu_custom_call.1} parent=1 // pred_region
      _
    $region17: #{tpu_custom_call.1} parent=1 // pred_fallthru
      _
    // Predicated region
    $region18: #{tpu_custom_call.1} parent=1 // pred_check
      _
    $region19: #{tpu_custom_call.1} parent=1 // pred_check_branch
      %30 = sbr.rel (0) target = $region21
    $region20: #{tpu_custom_call.1} parent=1 // pred_region
      %31 = dma.done [#allocation3], 64
    $region21: #{tpu_custom_call.1} parent=1 // pred_fallthru
      _
    %v32 = vld [vmem:[#allocation2] sm:$0x3]
    %v33 = vld [vmem:[#allocation2 + $0x2] sm:$0x3]
    %v34 = vld [vmem:[%s1] sm:$0x3]
    %v35 = vld [vmem:[%s2] sm:$0x3]
    %v36 = vld [vmem:[%s3] sm:$0x3]
    %37 = vrot.lane.b32.xlu0 %v32, 127
    %v38 = vpop.permute.xlu0 %37
    %39 = vrot.lane.b32.xlu0 %v33, 127
    %v40 = vpop.permute.xlu0 %39
    %41 = vrot.lane.b32.xlu0 %v32, 1
    %v42 = vpop.permute.xlu0 %41
    %43 = vrot.lane.b32.xlu0 %v33, 1
    %v44 = vpop.permute.xlu0 %43
    %v45 = vmul.f32 %v32, %v34
    %v46 = vmul.f32 %v33, %v34
    %v47 = vmul.f32 %v38, %v35
    %v48 = vmul.f32 %v40, %v35
    %v49 = vadd.f32 %v45, %v47
    %v50 = vadd.f32 %v46, %v48
    %v51 = vmul.f32 %v42, %v36
    %v52 = vmul.f32 %v44, %v36
    %v53 = vadd.f32 %v49, %v51
    %v54 = vadd.f32 %v50, %v52
    %55 = vst [vmem:[#allocation5] sm:$0x3] %v53
    %56 = vst [vmem:[#allocation5 + $0x2] sm:$0x3] %v54
    // Predicated region
    $region22: #{tpu_custom_call.1} parent=1 // pred_check
      _
    $region23: #{tpu_custom_call.1} parent=1 // pred_check_branch
      %58 = sbr.rel (0) target = $region25
    $region24: #{tpu_custom_call.1} parent=1 // pred_region
      %s60 = ssub.s32 64, 64
      %61 = vsyncadd [#allocation4], %s60
      %s62 = sshll.u32 [#allocation5], 4
      %s63 = int_to_ptr.vmem [resolvable:$true] %s62
      %68 = dma.vmem_to_hbm [thread:$0]  %s63, 64, %s4, [#allocation4], 32, 32, 2
    $region25: #{tpu_custom_call.1} parent=1 // pred_fallthru
      _
    // Predicated region
    $region26: #{tpu_custom_call.1} parent=1 // pred_check
      _
    $region27: #{tpu_custom_call.1} parent=1 // pred_check_branch
      %70 = sbr.rel (0) target = $region29
    $region28: #{tpu_custom_call.1} parent=1 // pred_region
      %71 = dma.done [#allocation4], 64
    $region29: #{tpu_custom_call.1} parent=1 // pred_fallthru
      _
    %72 = vsyncpa [#allocation3], 1
    %73 = vsyncpa [#allocation4], 1

</llo_original>
